<compile_context>
chip_gen: v6e
topology: v6e:2x2x1
jax: 0.10.0
libtpu: 0.0.40
codegen_flags: <defaults>
</compile_context>

<pallas_src>
import functools

import jax
import jax.numpy as jnp
from jax.experimental import pallas as pl
from jax.experimental.pallas import tpu as pltpu

EPS = 1e-9
_SUBLANES = 8
_LANES = 128


def _contrastive_loss_kernel(o1_ref, o2_ref, tgt_ref, out_ref, *,
                             margin, batch, tile_rows):
    # o1_ref, o2_ref: (TB, D) in native dtype (f32 / bf16 / ...), VMEM
    # tgt_ref:        (TB, 1) f32 (1.0 = same class, 0.0 = different), VMEM
    # out_ref:        (8, 128) f32 per-tile partial-sum block, VMEM
    #
    # Cast on load: keeps HBM traffic at the narrow dtype, compute in f32
    # (also the right choice on v5e, which has no bf16 VPU path).
    o1 = o1_ref[...].astype(jnp.float32)
    o2 = o2_ref[...].astype(jnp.float32)
    diff = o2 - o1                                                  # VPU
    distances = jnp.sum(diff * diff, axis=1, keepdims=True)         # (TB, 1) XLU reduce
    t = tgt_ref[...]                                                # (TB, 1)
    hinge = jnp.maximum(margin - jnp.sqrt(distances + EPS), 0.0)
    losses = 0.5 * (t * distances + (1.0 - t) * hinge * hinge)      # (TB, 1)

    # Ragged tail: boundary-block rows past the true batch read unspecified
    # data — select them to exactly 0 (select, so NaN/inf garbage can't leak).
    row0 = pl.program_id(0) * tile_rows
    row_ids = row0 + jax.lax.broadcasted_iota(jnp.int32, (tile_rows, 1), 0)
    losses = jnp.where(row_ids < batch, losses, 0.0)

    tile_sum = jnp.sum(losses, keepdims=True)                       # (1, 1)
    # Lane/sublane-dense partial-sum block -> unmasked vector store.
    out_ref[...] = jnp.broadcast_to(tile_sum, (_SUBLANES, _LANES))


def _pick_tile_rows(batch, feat_dim, itemsize, target_tile_bytes=2 * 1024 * 1024):
    """Rows per tile: multiple of 8, ~2 MiB per input tile, capped near B."""
    rows = (target_tile_bytes // max(1, feat_dim * itemsize)) // _SUBLANES * _SUBLANES
    rows = max(_SUBLANES, rows)
    batch_rounded = pl.cdiv(batch, _SUBLANES) * _SUBLANES
    return int(min(rows, batch_rounded))


def contrastive_loss(output1, output2, target, *, margin=1.0,
                     size_average=True, tile_rows=None):
    B, D = output1.shape
    tgt = target.astype(jnp.float32).reshape(B, 1)

    itemsize = jnp.dtype(output1.dtype).itemsize
    TB = int(tile_rows) if tile_rows is not None else _pick_tile_rows(B, D, itemsize)
    # (8,128) rule: second-to-last block dim must be a multiple of 8 or the full dim.
    assert TB % _SUBLANES == 0 or TB == B, "tile_rows must be a multiple of 8 (or == B)"
    num_tiles = int(pl.cdiv(B, TB))

    partials = pl.pallas_call(
        functools.partial(_contrastive_loss_kernel, margin=float(margin),
                          batch=B, tile_rows=TB),
        out_shape=jax.ShapeDtypeStruct((num_tiles * _SUBLANES, _LANES), jnp.float32),
        grid=(num_tiles,),
        in_specs=[
            pl.BlockSpec((TB, D), lambda i: (i, 0)),
            pl.BlockSpec((TB, D), lambda i: (i, 0)),
            pl.BlockSpec((TB, 1), lambda i: (i, 0)),
        ],
        out_specs=pl.BlockSpec((_SUBLANES, _LANES), lambda i: (i, 0)),
        compiler_params=pltpu.CompilerParams(
            # No shared accumulator: each tile owns its output block, so the
            # batch axis can be sharded across TensorCores (v7x megacore).
            dimension_semantics=("parallel",),
        ),
    )(output1, output2, tgt)

    per_tile = partials.reshape(num_tiles, _SUBLANES, _LANES)[:, 0, 0]
    total = jnp.sum(per_tile)
    return total / B if size_average else total


def contrastive_loss_ref(output1, output2, target, *, margin=1.0, size_average=True):
    # Pure-JAX reference mirroring the PyTorch forward.
    o1 = output1.astype(jnp.float32)
    o2 = output2.astype(jnp.float32)
    distances = jnp.sum((o2 - o1) ** 2, axis=1)
    t = target.astype(jnp.float32)
    hinge = jnp.maximum(margin - jnp.sqrt(distances + EPS), 0.0)
    losses = 0.5 * (t * distances + (1.0 - t) * hinge ** 2)
    return jnp.mean(losses) if size_average else jnp.sum(losses)


if __name__ == "__main__":
    key = jax.random.PRNGKey(0)
    k1, k2, k3 = jax.random.split(key, 3)

    # Odd batch exercises the in-kernel ragged-tail mask; tile_rows=8 exercises
    # a multi-tile grid with per-tile partial sums.
    B, D = 13, 32
    o1 = jax.random.normal(k1, (B, D), dtype=jnp.float32)
    o2 = jax.random.normal(k2, (B, D), dtype=jnp.float32)
    tgt = jax.random.bernoulli(k3, 0.5, (B,)).astype(jnp.int32)

    ref = contrastive_loss_ref(o1, o2, tgt, margin=1.0)

    # f32, forced 2-tile grid (last tile ragged: rows 8..12 valid, 13..15 masked)
    loss = contrastive_loss(o1, o2, tgt, margin=1.0, tile_rows=8)
    jax.block_until_ready(loss)
    assert jnp.allclose(loss, ref, rtol=1e-5, atol=1e-6), (loss, ref)

    # f32, auto-selected tile size (single boundary tile of 16 rows on a 13-row array)
    loss_auto = contrastive_loss(o1, o2, tgt, margin=1.0)
    jax.block_until_ready(loss_auto)
    assert jnp.allclose(loss_auto, ref, rtol=1e-5, atol=1e-6), (loss_auto, ref)

    # size_average=False path (sum, not mean)
    ref_sum = contrastive_loss_ref(o1, o2, tgt, margin=1.0, size_average=False)
    loss_sum = contrastive_loss(o1, o2, tgt, margin=1.0, size_average=False, tile_rows=8)
    jax.block_until_ready(loss_sum)
    assert jnp.allclose(loss_sum, ref_sum, rtol=1e-5, atol=1e-5), (loss_sum, ref_sum)

    # bf16 inputs stay bf16 in HBM; the kernel casts on load.
    o1_bf, o2_bf = o1.astype(jnp.bfloat16), o2.astype(jnp.bfloat16)
    loss_bf = contrastive_loss(o1_bf, o2_bf, tgt, margin=1.0, tile_rows=8)
    jax.block_until_ready(loss_bf)
    ref_bf = contrastive_loss_ref(o1_bf, o2_bf, tgt, margin=1.0)
    assert jnp.allclose(loss_bf, ref_bf, rtol=1e-5, atol=1e-5), (loss_bf, ref_bf)

    print("KERNEL_OK")
</pallas_src>

<mosaic_0001>
module attributes {stable_mosaic.version = 11 : i64} {
  func.func @_contrastive_loss_kernel(%arg0: i32, %arg1: memref<8x32xf32, #tpu.memory_space<vmem>>, %arg2: memref<8x32xf32, #tpu.memory_space<vmem>>, %arg3: memref<8x1xf32, #tpu.memory_space<vmem>>, %arg4: memref<8x128xf32, #tpu.memory_space<vmem>>) attributes {dimension_semantics = [#tpu.dimension_semantics<parallel>], iteration_bounds = array<i64: 2>, scalar_prefetch = 0 : i64, scratch_operands = 0 : i64, tpu.core_type = #tpu.core_type<tc>, window_params = [{transform_indices = @transform_0, window_bounds = array<i64: 8, 32>}, {transform_indices = @transform_1, window_bounds = array<i64: 8, 32>}, {transform_indices = @transform_2, window_bounds = array<i64: 8, 1>}, {transform_indices = @transform_3, window_bounds = array<i64: 8, 128>}]} {
    %c0 = arith.constant 0 : index
    %c0_0 = arith.constant 0 : index
    %0 = vector.load %arg1[%c0, %c0_0] : memref<8x32xf32, #tpu.memory_space<vmem>>, vector<8x32xf32>
    %c0_1 = arith.constant 0 : index
    %c0_2 = arith.constant 0 : index
    %1 = vector.load %arg2[%c0_1, %c0_2] : memref<8x32xf32, #tpu.memory_space<vmem>>, vector<8x32xf32>
    %2 = arith.subf %1, %0 : vector<8x32xf32>
    %3 = arith.mulf %2, %2 : vector<8x32xf32>
    %cst = arith.constant dense<0.000000e+00> : vector<8xf32>
    %4 = vector.multi_reduction <add>, %3, %cst [1] : vector<8x32xf32> to vector<8xf32>
    %5 = vector.shape_cast %4 : vector<8xf32> to vector<8x1xf32>
    %c0_3 = arith.constant 0 : index
    %c0_4 = arith.constant 0 : index
    %6 = vector.load %arg3[%c0_3, %c0_4] : memref<8x1xf32, #tpu.memory_space<vmem>>, vector<8x1xf32>
    %cst_5 = arith.constant 9.99999971E-10 : f32
    %7 = vector.broadcast %cst_5 : f32 to vector<8x1xf32>
    %8 = arith.addf %5, %7 : vector<8x1xf32>
    %9 = math.sqrt %8 : vector<8x1xf32>
    %cst_6 = arith.constant 1.000000e+00 : f32
    %10 = vector.broadcast %cst_6 : f32 to vector<8x1xf32>
    %11 = arith.subf %10, %9 : vector<8x1xf32>
    %cst_7 = arith.constant 0.000000e+00 : f32
    %12 = vector.broadcast %cst_7 : f32 to vector<8x1xf32>
    %13 = arith.maximumf %11, %12 : vector<8x1xf32>
    %14 = arith.mulf %6, %5 : vector<8x1xf32>
    %cst_8 = arith.constant 1.000000e+00 : f32
    %15 = vector.broadcast %cst_8 : f32 to vector<8x1xf32>
    %16 = arith.subf %15, %6 : vector<8x1xf32>
    %17 = arith.mulf %16, %13 : vector<8x1xf32>
    %18 = arith.mulf %17, %13 : vector<8x1xf32>
    %19 = arith.addf %14, %18 : vector<8x1xf32>
    %cst_9 = arith.constant 5.000000e-01 : f32
    %20 = vector.broadcast %cst_9 : f32 to vector<8x1xf32>
    %21 = arith.mulf %20, %19 : vector<8x1xf32>
    %c8_i32 = arith.constant 8 : i32
    %22 = arith.muli %arg0, %c8_i32 : i32
    %23 = tpu.iota {dimensions = array<i32: 0>} : vector<8x1xi32>
    %24 = vector.broadcast %22 : i32 to vector<8x1xi32>
    %25 = arith.addi %24, %23 : vector<8x1xi32>
    %c13_i32 = arith.constant 13 : i32
    %26 = vector.broadcast %c13_i32 : i32 to vector<8x1xi32>
    %27 = arith.cmpi slt, %25, %26 : vector<8x1xi32>
    %cst_10 = arith.constant 0.000000e+00 : f32
    %28 = vector.broadcast %cst_10 : f32 to vector<8x1xf32>
    %29 = arith.select %27, %21, %28 : vector<8x1xi1>, vector<8x1xf32>
    %30 = vector.shape_cast %29 : vector<8x1xf32> to vector<1x8x1xf32>
    %cst_11 = arith.constant dense<0.000000e+00> : vector<1xf32>
    %31 = vector.multi_reduction <add>, %30, %cst_11 [1, 2] : vector<1x8x1xf32> to vector<1xf32>
    %32 = vector.shape_cast %31 : vector<1xf32> to vector<1x1x1xf32>
    %33 = vector.extract %32[0, 0, 0] : f32 from vector<1x1x1xf32>
    %34 = vector.broadcast %33 : f32 to vector<1x1xf32>
    %35 = vector.shape_cast %34 : vector<1x1xf32> to vector<1x1xf32>
    %36 = vector.broadcast %35 : vector<1x1xf32> to vector<8x128xf32>
    %c0_12 = arith.constant 0 : index
    %c0_13 = arith.constant 0 : index
    %37 = vector.load %arg4[%c0_12, %c0_13] : memref<8x128xf32, #tpu.memory_space<vmem>>, vector<8x128xf32>
    tpu.vector_store %arg4[%c0_12, %c0_13], %36 {strides = array<i32>} : memref<8x128xf32, #tpu.memory_space<vmem>>, vector<8x128xf32>,
    return
  }
  func.func @transform_0(%arg0: i32) -> (i32, i32) {
    %c0_i32 = arith.constant 0 : i32
    %c0_i32_0 = arith.constant 0 : i32
    return %arg0, %c0_i32 : i32, i32
  }
  func.func @transform_1(%arg0: i32) -> (i32, i32) {
    %c0_i32 = arith.constant 0 : i32
    %c0_i32_0 = arith.constant 0 : i32
    return %arg0, %c0_i32 : i32, i32
  }
  func.func @transform_2(%arg0: i32) -> (i32, i32) {
    %c0_i32 = arith.constant 0 : i32
    %c0_i32_0 = arith.constant 0 : i32
    return %arg0, %c0_i32 : i32, i32
  }
  func.func @transform_3(%arg0: i32) -> (i32, i32) {
    %c0_i32 = arith.constant 0 : i32
    %c0_i32_0 = arith.constant 0 : i32
    return %arg0, %c0_i32 : i32, i32
  }
}

</mosaic_0001>

<llo_original>
// kernel: tpu_custom_call.1
$region0: #{tpu_custom_call.1}
  #allocation0 [shape = 'u32[]', space=smem, size = 0x4, offset = 0x4, fixed_abs, tag = 'smem constant byte address 0x4 - core index']
  #allocation1 [shape = 'u32[144,128]{1,0:T(1,128)}', space=vmem, size = 0x12000, scoped, tag = 'internal scratch']
  %s0 = inlined_call_operand.vmem [shape: f32[13,32], index: 0, kind: input, shape index: {}]
  %s1 = inlined_call_operand.hbm [shape: f32[13,32], index: 1, kind: input, shape index: {}]
  %s2 = inlined_call_operand.vmem [shape: f32[13,1], index: 2, kind: input, shape index: {}]
  %s3 = inlined_call_operand.hbm [shape: f32[16,128], index: 3, kind: output, shape index: {}]
  %s4 = sld [smem:[#allocation0]]
  $region49: #{tpu_custom_call.1} parent=0
    _
  %s6 = ssub.s32 1, %s4
  %s7 = scalar_select 0, %s6, %s4
  $region1: #{tpu_custom_call.1} parent=0
    #allocation2 [shape = 'u8[8192]{0}', space=vmem, size = 0x2000, scoped, tag = 'input window, operand 1']
    #allocation3 [shape = 's32[2]{0}', space=sflag, size = 0x8, scoped, tag = 'scoped memory for tpu_custom_call.1']
    #allocation4 [shape = 's32[2]{0}', space=sflag, size = 0x8, scoped, tag = 'scoped memory for tpu_custom_call.1']
    #allocation5 [shape = 'u8[8192]{0}', space=vmem, size = 0x2000, scoped, tag = 'output window, operand 0']
    %8 = vsyncpa [#allocation3], 0
    %s9 = scalar_lea.sflag [#allocation3], 1
    %10 = vsyncpa %s9, 0
    %11 = vsyncpa [#allocation4], 0
    %s12 = scalar_lea.sflag [#allocation4], 1
    %13 = vsyncpa %s12, 0
    loop: start=0, step=1, limit=4
    $region2: #{tpu_custom_call.1} parent=1 // loop_pre_header
      _
    $region3: #{tpu_custom_call.1} parent=1 // loop_header
      %s15 = sphi 0, %s19
      %p16 = scmp.ge.s32.totalorder %s15, 4
      %s25 = sphi 0, %s27
      %s28 = sphi 0, %s25
      %s29 = sphi 0, %s28
      %s45 = sphi 0, %s29
      %s51 = sphi 0, %s53
      %s54 = sphi 0, %s51
      %s55 = sphi 0, %s54
      %s71 = sphi 0, %s55
      %s77 = sphi 0, %s79
      %s80 = sphi 0, %s77
      %s81 = sphi 0, %s80
      %s97 = sphi 0, %s81
      %s103 = sphi 0, %s105
      %s106 = sphi 0, %s103
      %s107 = sphi 0, %s106
      %s123 = sphi 0, %s107
    $region4: #{tpu_custom_call.1} parent=1 // loop_header_branch
      %18 = sbr.rel (%p16) target = $region8
    $region5: #{tpu_custom_call.1} parent=1 // loop_body
      %s20 = ssub.s32 %s15, 1
      %s21 = ssub.s32 %s15, 2
      %s22 = sadd.s32 %s15, 1
      %s23 = ssub.s32 %s15, %s22
      %p24 = scmp.eq.s32.totalorder %s23, 0
      %s26 = sadd.s32 %s25, 1
      %s27 = scalar_select %p24, %s25, %s26
      %p30 = pneg %p24
      %p31 = scmp.eq.s32.totalorder %s15, 1
      %p32 = por %p30, %p31
      %p33 = scmp.ne.s32.totalorder %s25, %s28
      %p34 = scmp.eq.s32.totalorder %s15, 0
      %p35 = por %p33, %p34
      %p36 = scmp.ne.s32.totalorder %s25, %s28
      %p37 = scmp.eq.s32.totalorder %s20, 1
      %p38 = por %p36, %p37
      %p39 = scmp.ne.s32.totalorder %s28, %s29
      %p40 = scmp.eq.s32.totalorder %s20, 0
      %p41 = por %p39, %p40
      %p42 = scmp.ne.s32.totalorder %s28, %s29
      %p43 = scmp.eq.s32.totalorder %s21, 1
      %p44 = por %p42, %p43
      %p46 = scmp.ne.s32.totalorder %s29, %s45
      %p47 = scmp.eq.s32.totalorder %s21, 0
      %p48 = por %p46, %p47
      %s49 = ssub.s32 %s15, %s22
      %p50 = scmp.eq.s32.totalorder %s49, 0
      %s52 = sadd.s32 %s51, 1
      %s53 = scalar_select %p50, %s51, %s52
      %p56 = pneg %p50
      %p57 = scmp.eq.s32.totalorder %s15, 1
      %p58 = por %p56, %p57
      %p59 = scmp.ne.s32.totalorder %s51, %s54
      %p60 = scmp.eq.s32.totalorder %s15, 0
      %p61 = por %p59, %p60
      %p62 = scmp.ne.s32.totalorder %s51, %s54
      %p63 = scmp.eq.s32.totalorder %s20, 1
      %p64 = por %p62, %p63
      %p65 = scmp.ne.s32.totalorder %s54, %s55
      %p66 = scmp.eq.s32.totalorder %s20, 0
      %p67 = por %p65, %p66
      %p68 = scmp.ne.s32.totalorder %s54, %s55
      %p69 = scmp.eq.s32.totalorder %s21, 1
      %p70 = por %p68, %p69
      %p72 = scmp.ne.s32.totalorder %s55, %s71
      %p73 = scmp.eq.s32.totalorder %s21, 0
      %p74 = por %p72, %p73
      %s75 = ssub.s32 %s15, %s22
      %p76 = scmp.eq.s32.totalorder %s75, 0
      %s78 = sadd.s32 %s77, 1
      %s79 = scalar_select %p76, %s77, %s78
      %p82 = pneg %p76
      %p83 = scmp.eq.s32.totalorder %s15, 1
      %p84 = por %p82, %p83
      %p85 = scmp.ne.s32.totalorder %s77, %s80
      %p86 = scmp.eq.s32.totalorder %s15, 0
      %p87 = por %p85, %p86
      %p88 = scmp.ne.s32.totalorder %s77, %s80
      %p89 = scmp.eq.s32.totalorder %s20, 1
      %p90 = por %p88, %p89
      %p91 = scmp.ne.s32.totalorder %s80, %s81
      %p92 = scmp.eq.s32.totalorder %s20, 0
      %p93 = por %p91, %p92
      %p94 = scmp.ne.s32.totalorder %s80, %s81
      %p95 = scmp.eq.s32.totalorder %s21, 1
      %p96 = por %p94, %p95
      %p98 = scmp.ne.s32.totalorder %s81, %s97
      %p99 = scmp.eq.s32.totalorder %s21, 0
      %p100 = por %p98, %p99
      %s101 = ssub.s32 %s15, %s22
      %p102 = scmp.eq.s32.totalorder %s101, 0
      %s104 = sadd.s32 %s103, 1
      %s105 = scalar_select %p102, %s103, %s104
      %p108 = pneg %p102
      %p109 = scmp.eq.s32.totalorder %s15, 1
      %p110 = por %p108, %p109
      %p111 = scmp.ne.s32.totalorder %s103, %s106
      %p112 = scmp.eq.s32.totalorder %s15, 0
      %p113 = por %p111, %p112
      %p114 = scmp.ne.s32.totalorder %s103, %s106
      %p115 = scmp.eq.s32.totalorder %s20, 1
      %p116 = por %p114, %p115
      %p117 = scmp.ne.s32.totalorder %s106, %s107
      %p118 = scmp.eq.s32.totalorder %s20, 0
      %p119 = por %p117, %p118
      %p120 = scmp.ne.s32.totalorder %s106, %s107
      %p121 = scmp.eq.s32.totalorder %s21, 1
      %p122 = por %p120, %p121
      %p124 = scmp.ne.s32.totalorder %s107, %s123
      %p125 = scmp.eq.s32.totalorder %s21, 0
      %p126 = por %p124, %p125
      %p127 = scmp.le.s32.totalorder 1, %s15
      %p128 = scmp.lt.s32.totalorder %s15, 3
      %p129 = pnand %p127, %p128
      %p130 = pneg %p129
      // Predicated region
      $region9: #{tpu_custom_call.1} parent=5 // pred_check
        _
      $region10: #{tpu_custom_call.1} parent=5 // pred_check_branch
        %132 = sbr.rel (%p129) target = $region12
      $region11: #{tpu_custom_call.1} parent=5 // pred_region
        %s133 = ssub.s32 %s15, 1
      $region12: #{tpu_custom_call.1} parent=5 // pred_fallthru
        _
      %p134 = scmp.lt.s32.totalorder %s15, 2
      // Predicated region
      $region13: #{tpu_custom_call.1} parent=5 // pred_check
        %p135 = pneg %p134
      $region14: #{tpu_custom_call.1} parent=5 // pred_check_branch
        %137 = sbr.rel (%p135) target = $region16
      $region15: #{tpu_custom_call.1} parent=5 // pred_region
        // Predicated region
        $region17: #{tpu_custom_call.1} parent=15 // pred_check
          %p138 = pneg %p35
        $region18: #{tpu_custom_call.1} parent=15 // pred_check_branch
          %140 = sbr.rel (%p138) target = $region20
        $region19: #{tpu_custom_call.1} parent=15 // pred_region
          %p141 = scmp.lt.s32.totalorder %s15, 1
          %s142 = scalar_select %p141, %s15, 1
          %s143 = smul.addr %s142, 8
          %s144 = scalar_lea.vmem %s0, %s143
        $region20: #{tpu_custom_call.1} parent=15 // pred_fallthru
          _
        // Predicated region
        $region21: #{tpu_custom_call.1} parent=15 // pred_check
          %p145 = pneg %p61
        $region22: #{tpu_custom_call.1} parent=15 // pred_check_branch
          %147 = sbr.rel (%p145) target = $region24
        $region23: #{tpu_custom_call.1} parent=15 // pred_region
          %s148 = sand.u32 %s51, 1
          %s149 = scalar_lea.sflag [#allocation3], %s148
          %s150 = sand.u32 %s51, 1
          %s151 = smul.addr %s150, 8
          %s152 = scalar_lea.vmem [#allocation2], %s151
          %s154 = ssub.s32 128, 128
          %155 = vsyncadd %s149, %s154
          %s156 = smul.addr %s15, 128
          %s157 = scalar_lea.hbm %s1, %s156
          %s159 = sshll.u32 %s152, 4
          %s160 = int_to_ptr.vmem [resolvable:$true] %s159
          %162 = dma.hbm_to_vmem [thread:$0]  %s157, 128, %s160, %s149
        $region24: #{tpu_custom_call.1} parent=15 // pred_fallthru
          _
        // Predicated region
        $region25: #{tpu_custom_call.1} parent=15 // pred_check
          %p163 = pneg %p87
        $region26: #{tpu_custom_call.1} parent=15 // pred_check_branch
          %165 = sbr.rel (%p163) target = $region28
        $region27: #{tpu_custom_call.1} parent=15 // pred_region
          %p166 = scmp.lt.s32.totalorder %s15, 1
          %s167 = scalar_select %p166, %s15, 1
          %s168 = smul.addr %s167, 8
          %s169 = scalar_lea.vmem %s2, %s168
        $region28: #{tpu_custom_call.1} parent=15 // pred_fallthru
          _
      $region16: #{tpu_custom_call.1} parent=5 // pred_fallthru
        _
      %p170 = scmp.le.s32.totalorder 1, %s15
      %p171 = scmp.lt.s32.totalorder %s15, 3
      %p172 = pnand %p170, %p171
      %p173 = pneg %p172
      // Predicated region
      $region29: #{tpu_custom_call.1} parent=5 // pred_check
        _
      $region30: #{tpu_custom_call.1} parent=5 // pred_check_branch
        %175 = sbr.rel (%p172) target = $region32
      $region31: #{tpu_custom_call.1} parent=5 // pred_region
        %s176 = ssub.s32 %s15, 1
        %s177 = sand.u32 %s54, 1
        %s178 = scalar_lea.sflag [#allocation3], %s177
        %s179 = sand.u32 %s54, 1
        %s180 = smul.addr %s179, 8
        %s181 = scalar_lea.vmem [#allocation2], %s180
        // Predicated region
        $region33: #{tpu_custom_call.1} parent=31 // pred_check
          %p182 = pneg %p67
        $region34: #{tpu_custom_call.1} parent=31 // pred_check_branch
          %184 = sbr.rel (%p182) target = $region36
        $region35: #{tpu_custom_call.1} parent=31 // pred_region
          %185 = dma.done %s178, 128
        $region36: #{tpu_custom_call.1} parent=31 // pred_fallthru
          _
        %p186 = scmp.lt.s32.totalorder %s20, 1
        %s187 = scalar_select %p186, %s20, 1
        %s188 = smul.addr %s187, 8
        %s189 = scalar_lea.vmem %s0, %s188
        %p190 = pneg %p41
        %p191 = pneg %p38
        %s192 = sand.u32 %s54, 1
        %s193 = scalar_lea.sflag [#allocation3], %s192
        %s194 = sand.u32 %s54, 1
        %s195 = smul.addr %s194, 8
        %s196 = scalar_lea.vmem [#allocation2], %s195
        %p197 = pneg %p67
        %p198 = pneg %p64
        %p199 = scmp.lt.s32.totalorder %s20, 1
        %s200 = scalar_select %p199, %s20, 1
        %s201 = smul.addr %s200, 8
        %s202 = scalar_lea.vmem %s2, %s201
        %p203 = pneg %p93
        %p204 = pneg %p90
        %p205 = pneg %p119
        %p206 = pneg %p116
        %s207 = sand.u32 %s106, 1
        %s208 = scalar_lea.sflag [#allocation4], %s207
        %s209 = sand.u32 %s106, 1
        %s210 = smul.addr %s209, 8
        %s211 = scalar_lea.vmem [#allocation5], %s210
        %p212 = scmp.lt.s32.totalorder %s20, 1
        %s213 = scalar_select %p212, %s20, 1
        %s214 = smul.addr %s213, 8
        %s215 = scalar_lea.vmem %s0, %s214
        %p216 = scmp.lt.s32.totalorder %s20, 1
        %s217 = scalar_select %p216, %s20, 1
        %s218 = smul.addr %s217, 8
        %s219 = scalar_lea.vmem %s2, %s218
        %v220 = vld [vmem:[%s215] sm:$0xff]
        %v221 = vld [vmem:[%s181] sm:$0xff]
        %v222 = vsub.f32 %v221, %v220
        %v223 = vmul.f32 %v222, %v222
        %vm224 = vcmask 261120
        %v225 = vsel %vm224, %v223, 0.0
        %226 = vadd.xlane.f32.xlu0 %v225
        %v227 = vpop.xlane.xlu0 %226
        %v228 = vld [vmem:[%s219] sm:$0xff]
        %v229 = vadd.f32 %v227, 1e-09
        %v230 = vrsqrt.pop %v229
        %v231 = vmul.f32 %v229, %v230
        %vm232 = vcmp.eq.f32.partialorder %v229, inf
        %v233 = vsel %vm232, %v229, %v231
        %vm234 = vcmp.eq.f32.partialorder %v229, 0.0
        %v235 = vand.u32 %v229, 2147483648
        %v236 = vsel %vm234, %v235, %v233
        %v237 = vsub.f32 1.0, %v236
        %v238 = vmax.f32 %v237, 0.0
        %v239 = vmul.f32 %v228, %v227
        %v240 = vsub.f32 1.0, %v228
        %v241 = vmul.f32 %v240, %v238
        %v242 = vmul.f32 %v241, %v238
        %v243 = vadd.f32 %v239, %v242
        %v244 = vmul.f32 %v243, 0.5
        %s245 = smul.u32 %s20, 8
        %v246 = vlaneseq
        %v247 = vshrl.u32 %v246, 7
        %v248 = vstv %s245
        %v249 = vadd.s32 %v248, %v247
        %vm250 = vcmp.lt.s32.totalorder %v249, 13
        %v251 = vsel %vm250, %v244, 0.0
        %vm252 = vcmask 7168
        %v253 = vsel %vm252, %v251, 0.0
        %254 = vadd.xlane.f32.xlu0 %v253
        %v255 = vpop.xlane.xlu0 %254
        %v256 = vrot.slane %v255, 4
        %v257 = vadd.f32 %v255, %v256
        %v258 = vrot.slane %v257, 2
        %v259 = vadd.f32 %v257, %v258
        %v260 = vrot.slane %v259, 1
        %v261 = vadd.f32 %v259, %v260
        %s262 = vtos %v261
        %v263 = vstv %s262
        %264 = vst [vmem:[%s211] sm:$0xff] %v263
        %s265 = sand.u32 %s106, 1
        %s266 = scalar_lea.sflag [#allocation4], %s265
        %s267 = sand.u32 %s106, 1
        %s268 = smul.addr %s267, 8
        %s269 = scalar_lea.vmem [#allocation5], %s268
        // Predicated region
        $region37: #{tpu_custom_call.1} parent=31 // pred_check
          %p270 = pneg %p116
        $region38: #{tpu_custom_call.1} parent=31 // pred_check_branch
          %272 = sbr.rel (%p270) target = $region40
        $region39: #{tpu_custom_call.1} parent=31 // pred_region
          %s274 = ssub.s32 128, 128
          %275 = vsyncadd %s266, %s274
          %s276 = smul.addr %s20, 128
          %s277 = scalar_lea.hbm %s3, %s276
          %s279 = sshll.u32 %s269, 4
          %s280 = int_to_ptr.vmem [resolvable:$true] %s279
          %282 = dma.vmem_to_hbm [thread:$0]  %s280, 128, %s277, %s266
        $region40: #{tpu_custom_call.1} parent=31 // pred_fallthru
          _
      $region32: #{tpu_custom_call.1} parent=5 // pred_fallthru
        _
      %p283 = scmp.le.s32.totalorder 2, %s15
      // Predicated region
      $region41: #{tpu_custom_call.1} parent=5 // pred_check
        %p284 = pneg %p283
      $region42: #{tpu_custom_call.1} parent=5 // pred_check_branch
        %286 = sbr.rel (%p284) target = $region44
      $region43: #{tpu_custom_call.1} parent=5 // pred_region
        %s287 = ssub.s32 %s15, 2
        // Predicated region
        $region45: #{tpu_custom_call.1} parent=43 // pred_check
          %p288 = pneg %p122
        $region46: #{tpu_custom_call.1} parent=43 // pred_check_branch
          %290 = sbr.rel (%p288) target = $region48
        $region47: #{tpu_custom_call.1} parent=43 // pred_region
          %s291 = sand.u32 %s107, 1
          %s292 = scalar_lea.sflag [#allocation4], %s291
          %s293 = sand.u32 %s107, 1
          %s294 = smul.addr %s293, 8
          %s295 = scalar_lea.vmem [#allocation5], %s294
          %296 = dma.done %s292, 128
        $region48: #{tpu_custom_call.1} parent=43 // pred_fallthru
          _
      $region44: #{tpu_custom_call.1} parent=5 // pred_fallthru
        _
    $region6: #{tpu_custom_call.1} parent=1 // loop_footer
      %s19 = sadd.s32 1, %s15
    $region7: #{tpu_custom_call.1} parent=1 // loop_footer_branch
      %14 = sbr.rel target = $region3
    $region8: #{tpu_custom_call.1} parent=1 // loop_exit
      _
    %297 = vsyncpa [#allocation3], 1
    %s298 = scalar_lea.sflag [#allocation3], 1
    %299 = vsyncpa %s298, 1
    %300 = vsyncpa [#allocation4], 1
    %s301 = scalar_lea.sflag [#allocation4], 1
    %302 = vsyncpa %s301, 1

</llo_original>
